<compile_context>
chip_gen: v5e
topology: v5e:2x2
jax: 0.10.0
libtpu: 0.0.40
codegen_flags: <defaults>
</compile_context>

<pallas_src>
import functools

import jax
import jax.numpy as jnp
from jax.experimental import pallas as pl
from jax.experimental.pallas import tpu as pltpu


def _round_up(x, m):
    return (x + m - 1) // m * m


def _vmem_capacity_bytes():
    """Physical VMEM per TensorCore (v5e/v6e: 128 MiB, v7x: 64 MiB)."""
    try:
        cap = int(pltpu.get_tpu_info().vmem_capacity_bytes)
        if cap > 0:
            return cap
    except Exception:
        pass
    return 64 * 1024 * 1024  # conservative fallback (v7x per-core size)


def _fused_mlp_kernel(*refs, num_layers):
    # refs = (x_ref, w0, b0, w1, b1, ..., w_{L-1}, b_{L-1}, out_ref)
    x_ref = refs[0]
    out_ref = refs[-1]
    h = x_ref[...]                                    # (TILE_M, d_in) f32
    for i in range(num_layers):                       # unrolled at trace time
        w = refs[1 + 2 * i][...]                      # (d_i, d_{i+1}), VMEM-resident
        b = refs[2 + 2 * i][...]                      # (1, d_{i+1})
        # TODO(synk): bf16 operands + f32 accumulation for large shapes.
        h = jnp.dot(h, w, preferred_element_type=jnp.float32) + b
        if i < num_layers - 1:
            h = jnp.maximum(h, 0.0)
    out_ref[...] = h.astype(out_ref.dtype)


def mlp_forward(x, params, *, tile_m=1024):
    """x: (..., input_dim) -> (..., output_dim). Whole MLP in one pallas_call."""
    *lead, d_in = x.shape
    m = 1
    for s in lead:
        m *= s

    num_layers = len(params)
    dims = [params[0][0].shape[0]] + [w.shape[1] for (w, _) in params]
    assert dims[0] == d_in, (dims, d_in)
    d_out = dims[-1]

    x2d = x.reshape(m, d_in)
    if x2d.dtype != jnp.float32:
        x2d = x2d.astype(jnp.float32)

    # ---- VMEM-budgeted M tile (generation aware: v7x has half the VMEM) ----
    capacity = _vmem_capacity_bytes()
    budget = int(0.70 * capacity)                      # headroom for Mosaic scratch
    weight_bytes = sum(int(w.size) * 4 + int(b.size) * 4 for (w, b) in params)

    def footprint(tm_):
        # x tile (double-buffered) + out tile (double-buffered)
        # + live intermediate activation / matmul result + resident weights.
        return 4 * tm_ * (2 * d_in + 2 * d_out + 2 * max(dims)) + weight_bytes

    m_ceil8 = _round_up(max(m, 1), 8)
    tm = max(8, min(_round_up(tile_m, 8), m_ceil8))
    while tm > 8 and footprint(tm) > budget:
        tm = max(8, _round_up(tm // 2, 8))
    m_pad = _round_up(m, tm)
    grid = (m_pad // tm,)

    if m_pad != m:                                     # pad rows only when needed
        x2d = jnp.zeros((m_pad, d_in), jnp.float32).at[:m].set(x2d)

    vmem_limit = int(min(int(0.9 * capacity),
                         max(32 * 1024 * 1024, 2 * footprint(tm))))

    flops = sum(2 * m_pad * dims[i] * dims[i + 1] for i in range(num_layers))
    bytes_accessed = (m_pad * d_in + m_pad * d_out) * 4 + weight_bytes

    kernel = functools.partial(_fused_mlp_kernel, num_layers=num_layers)
    flat_inputs = [x2d] + [a for wb in params for a in wb]

    def make_call(single_buffer_weights):
        # Weights/biases are grid-invariant: DMA'd once, VMEM-resident across
        # all M tiles.  Single-buffering halves their VMEM footprint.
        wkw = {}
        if single_buffer_weights:
            wkw = dict(pipeline_mode=pl.Buffered(1))
        in_specs = [pl.BlockSpec((tm, d_in), lambda g: (g, 0))]
        for (w, b) in params:
            in_specs.append(pl.BlockSpec(w.shape, lambda g: (0, 0), **wkw))
            in_specs.append(pl.BlockSpec(b.shape, lambda g: (0, 0), **wkw))
        return pl.pallas_call(
            kernel,
            out_shape=jax.ShapeDtypeStruct((m_pad, d_out), jnp.float32),
            grid=grid,
            in_specs=in_specs,
            out_specs=pl.BlockSpec((tm, d_out), lambda g: (g, 0)),
            compiler_params=pltpu.CompilerParams(
                dimension_semantics=("parallel",),
                vmem_limit_bytes=vmem_limit,
            ),
            cost_estimate=pl.CostEstimate(
                flops=flops, transcendentals=0, bytes_accessed=bytes_accessed
            ),
        )

    try:
        out = make_call(True)(*flat_inputs)
    except Exception:
        # Fallback: default (double-buffered) weight specs; always supported.
        out = make_call(False)(*flat_inputs)

    if m_pad != m:
        out = out[:m]
    return out.reshape(*lead, d_out)


def init_mlp_params(key, input_dim, hidden_dim, output_dim, num_layers):
    """Deterministic init mirroring nn.Linear default U(-1/sqrt(in), 1/sqrt(in))."""
    h = [hidden_dim] * (num_layers - 1)
    dims = list(zip([input_dim] + h, h + [output_dim]))
    params = []
    for (n_in, n_out) in dims:
        key, kw, kb = jax.random.split(key, 3)
        bound = 1.0 / (n_in ** 0.5)
        w_t = jax.random.uniform(kw, (n_in, n_out), jnp.float32, -bound, bound)
        b = jax.random.uniform(kb, (1, n_out), jnp.float32, -bound, bound)
        params.append((w_t, b))
    return params


def mlp_reference(x, params):
    """Pure-JAX reference of the PyTorch forward."""
    num_layers = len(params)
    for i, (w_t, b) in enumerate(params):
        x = jnp.dot(x, w_t) + b[0]
        if i < num_layers - 1:
            x = jax.nn.relu(x)
    return x


if __name__ == "__main__":
    key = jax.random.PRNGKey(0)
    k_x, k_p = jax.random.split(key)

    # Small shapes consistent with the module: batch=2, seq=8, input_dim=16,
    # hidden_dim=32, output_dim=4, num_layers=3.
    B, S = 2, 8
    input_dim, hidden_dim, output_dim, num_layers = 16, 32, 4, 3

    x = jax.random.normal(k_x, (B, S, input_dim), jnp.float32)
    params = init_mlp_params(k_p, input_dim, hidden_dim, output_dim, num_layers)
    ref = mlp_reference(x, params)

    # Default path: single M tile (M=16 rows, grid=(1,)).
    out = jax.block_until_ready(mlp_forward(x, params))
    assert out.shape == (B, S, output_dim), out.shape
    assert jnp.allclose(out, ref, atol=1e-5, rtol=1e-5), "mismatch vs reference"

    # Also exercise the multi-tile grid path (tile_m=8 -> grid=(2,)).
    out_tiled = jax.block_until_ready(mlp_forward(x, params, tile_m=8))
    assert jnp.allclose(out_tiled, ref, atol=1e-5, rtol=1e-5), "tiled mismatch"

    print("KERNEL_OK")
</pallas_src>

<mosaic_0001>
module attributes {stable_mosaic.version = 11 : i64} {
  func.func @_fused_mlp_kernel(%arg0: i32, %arg1: memref<16x16xf32, #tpu.memory_space<vmem>>, %arg2: memref<16x32xf32, #tpu.memory_space<vmem>>, %arg3: memref<1x32xf32, #tpu.memory_space<vmem>>, %arg4: memref<32x32xf32, #tpu.memory_space<vmem>>, %arg5: memref<1x32xf32, #tpu.memory_space<vmem>>, %arg6: memref<32x4xf32, #tpu.memory_space<vmem>>, %arg7: memref<1x4xf32, #tpu.memory_space<vmem>>, %arg8: memref<16x4xf32, #tpu.memory_space<vmem>>) attributes {dimension_semantics = [#tpu.dimension_semantics<parallel>], iteration_bounds = array<i64: 1>, scalar_prefetch = 0 : i64, scratch_operands = 0 : i64, tpu.core_type = #tpu.core_type<tc>, window_params = [{transform_indices = @transform_0, window_bounds = array<i64: 16, 16>}, {pipeline_mode = #tpu.pipeline_mode<synchronous>, transform_indices = @transform_1, window_bounds = array<i64: 16, 32>}, {pipeline_mode = #tpu.pipeline_mode<synchronous>, transform_indices = @transform_2, window_bounds = array<i64: 1, 32>}, {pipeline_mode = #tpu.pipeline_mode<synchronous>, transform_indices = @transform_3, window_bounds = array<i64: 32, 32>}, {pipeline_mode = #tpu.pipeline_mode<synchronous>, transform_indices = @transform_4, window_bounds = array<i64: 1, 32>}, {pipeline_mode = #tpu.pipeline_mode<synchronous>, transform_indices = @transform_5, window_bounds = array<i64: 32, 4>}, {pipeline_mode = #tpu.pipeline_mode<synchronous>, transform_indices = @transform_6, window_bounds = array<i64: 1, 4>}, {transform_indices = @transform_7, window_bounds = array<i64: 16, 4>}]} {
    %c0 = arith.constant 0 : index
    %c0_0 = arith.constant 0 : index
    %0 = vector.load %arg1[%c0, %c0_0] : memref<16x16xf32, #tpu.memory_space<vmem>>, vector<16x16xf32>
    %c0_1 = arith.constant 0 : index
    %c0_2 = arith.constant 0 : index
    %1 = vector.load %arg2[%c0_1, %c0_2] : memref<16x32xf32, #tpu.memory_space<vmem>>, vector<16x32xf32>
    %c0_3 = arith.constant 0 : index
    %c0_4 = arith.constant 0 : index
    %2 = vector.load %arg3[%c0_3, %c0_4] : memref<1x32xf32, #tpu.memory_space<vmem>>, vector<1x32xf32>
    %cst = arith.constant dense<0.000000e+00> : vector<16x32xf32>
    %3 = tpu.matmul %0, %1, %cst {dimension_numbers = #tpu.dot_dimension_numbers<[1], [0], [0], [1], [0, 0, 1, 1], [], []>} : vector<16x16xf32>, vector<16x32xf32>, vector<16x32xf32> -> vector<16x32xf32>
    %4 = vector.broadcast %2 : vector<1x32xf32> to vector<16x32xf32>
    %5 = arith.addf %3, %4 : vector<16x32xf32>
    %cst_5 = arith.constant 0.000000e+00 : f32
    %6 = vector.broadcast %cst_5 : f32 to vector<16x32xf32>
    %7 = arith.maximumf %5, %6 : vector<16x32xf32>
    %c0_6 = arith.constant 0 : index
    %c0_7 = arith.constant 0 : index
    %8 = vector.load %arg4[%c0_6, %c0_7] : memref<32x32xf32, #tpu.memory_space<vmem>>, vector<32x32xf32>
    %c0_8 = arith.constant 0 : index
    %c0_9 = arith.constant 0 : index
    %9 = vector.load %arg5[%c0_8, %c0_9] : memref<1x32xf32, #tpu.memory_space<vmem>>, vector<1x32xf32>
    %cst_10 = arith.constant dense<0.000000e+00> : vector<16x32xf32>
    %10 = tpu.matmul %7, %8, %cst_10 {dimension_numbers = #tpu.dot_dimension_numbers<[1], [0], [0], [1], [0, 0, 1, 1], [], []>} : vector<16x32xf32>, vector<32x32xf32>, vector<16x32xf32> -> vector<16x32xf32>
    %11 = vector.broadcast %9 : vector<1x32xf32> to vector<16x32xf32>
    %12 = arith.addf %10, %11 : vector<16x32xf32>
    %cst_11 = arith.constant 0.000000e+00 : f32
    %13 = vector.broadcast %cst_11 : f32 to vector<16x32xf32>
    %14 = arith.maximumf %12, %13 : vector<16x32xf32>
    %c0_12 = arith.constant 0 : index
    %c0_13 = arith.constant 0 : index
    %15 = vector.load %arg6[%c0_12, %c0_13] : memref<32x4xf32, #tpu.memory_space<vmem>>, vector<32x4xf32>
    %c0_14 = arith.constant 0 : index
    %c0_15 = arith.constant 0 : index
    %16 = vector.load %arg7[%c0_14, %c0_15] : memref<1x4xf32, #tpu.memory_space<vmem>>, vector<1x4xf32>
    %cst_16 = arith.constant dense<0.000000e+00> : vector<16x4xf32>
    %17 = tpu.matmul %14, %15, %cst_16 {dimension_numbers = #tpu.dot_dimension_numbers<[1], [0], [0], [1], [0, 0, 1, 1], [], []>} : vector<16x32xf32>, vector<32x4xf32>, vector<16x4xf32> -> vector<16x4xf32>
    %18 = vector.broadcast %16 : vector<1x4xf32> to vector<16x4xf32>
    %19 = arith.addf %17, %18 : vector<16x4xf32>
    %c0_17 = arith.constant 0 : index
    %c0_18 = arith.constant 0 : index
    %20 = vector.load %arg8[%c0_17, %c0_18] : memref<16x4xf32, #tpu.memory_space<vmem>>, vector<16x4xf32>
    tpu.vector_store %arg8[%c0_17, %c0_18], %19 {strides = array<i32>} : memref<16x4xf32, #tpu.memory_space<vmem>>, vector<16x4xf32>,
    return
  }
  func.func @transform_0(%arg0: i32) -> (i32, i32) {
    %c0_i32 = arith.constant 0 : i32
    %c0_i32_0 = arith.constant 0 : i32
    return %arg0, %c0_i32 : i32, i32
  }
  func.func @transform_1(%arg0: i32) -> (i32, i32) {
    %c0_i32 = arith.constant 0 : i32
    %c0_i32_0 = arith.constant 0 : i32
    %c0_i32_1 = arith.constant 0 : i32
    return %c0_i32, %c0_i32_0 : i32, i32
  }
  func.func @transform_2(%arg0: i32) -> (i32, i32) {
    %c0_i32 = arith.constant 0 : i32
    %c0_i32_0 = arith.constant 0 : i32
    %c0_i32_1 = arith.constant 0 : i32
    return %c0_i32, %c0_i32_0 : i32, i32
  }
  func.func @transform_3(%arg0: i32) -> (i32, i32) {
    %c0_i32 = arith.constant 0 : i32
    %c0_i32_0 = arith.constant 0 : i32
    %c0_i32_1 = arith.constant 0 : i32
    return %c0_i32, %c0_i32_0 : i32, i32
  }
  func.func @transform_4(%arg0: i32) -> (i32, i32) {
    %c0_i32 = arith.constant 0 : i32
    %c0_i32_0 = arith.constant 0 : i32
    %c0_i32_1 = arith.constant 0 : i32
    return %c0_i32, %c0_i32_0 : i32, i32
  }
  func.func @transform_5(%arg0: i32) -> (i32, i32) {
    %c0_i32 = arith.constant 0 : i32
    %c0_i32_0 = arith.constant 0 : i32
    %c0_i32_1 = arith.constant 0 : i32
    return %c0_i32, %c0_i32_0 : i32, i32
  }
  func.func @transform_6(%arg0: i32) -> (i32, i32) {
    %c0_i32 = arith.constant 0 : i32
    %c0_i32_0 = arith.constant 0 : i32
    %c0_i32_1 = arith.constant 0 : i32
    return %c0_i32, %c0_i32_0 : i32, i32
  }
  func.func @transform_7(%arg0: i32) -> (i32, i32) {
    %c0_i32 = arith.constant 0 : i32
    %c0_i32_0 = arith.constant 0 : i32
    return %arg0, %c0_i32 : i32, i32
  }
}

module attributes {stable_mosaic.version = 11 : i64} {
  func.func @_fused_mlp_kernel(%arg0: i32, %arg1: memref<16x16xf32, #tpu.memory_space<vmem>>, %arg2: memref<16x32xf32, #tpu.memory_space<vmem>>, %arg3: memref<1x32xf32, #tpu.memory_space<vmem>>, %arg4: memref<32x32xf32, #tpu.memory_space<vmem>>, %arg5: memref<1x32xf32, #tpu.memory_space<vmem>>, %arg6: memref<32x4xf32, #tpu.memory_space<vmem>>, %arg7: memref<1x4xf32, #tpu.memory_space<vmem>>, %arg8: memref<16x4xf32, #tpu.memory_space<vmem>>) attributes {dimension_semantics = [#tpu.dimension_semantics<parallel>], iteration_bounds = array<i64: 1>, scalar_prefetch = 0 : i64, scratch_operands = 0 : i64, tpu.core_type = #tpu.core_type<tc>, window_params = [{transform_indices = @transform_0, window_bounds = array<i64: 16, 16>}, {pipeline_mode = #tpu.pipeline_mode<synchronous>, transform_indices = @transform_1, window_bounds = array<i64: 16, 32>}, {pipeline_mode = #tpu.pipeline_mode<synchronous>, transform_indices = @transform_2, window_bounds = array<i64: 1, 32>}, {pipeline_mode = #tpu.pipeline_mode<synchronous>, transform_indices = @transform_3, window_bounds = array<i64: 32, 32>}, {pipeline_mode = #tpu.pipeline_mode<synchronous>, transform_indices = @transform_4, window_bounds = array<i64: 1, 32>}, {pipeline_mode = #tpu.pipeline_mode<synchronous>, transform_indices = @transform_5, window_bounds = array<i64: 32, 4>}, {pipeline_mode = #tpu.pipeline_mode<synchronous>, transform_indices = @transform_6, window_bounds = array<i64: 1, 4>}, {transform_indices = @transform_7, window_bounds = array<i64: 16, 4>}]} {
    %c0 = arith.constant 0 : index
    %c0_0 = arith.constant 0 : index
    %0 = vector.load %arg1[%c0, %c0_0] : memref<16x16xf32, #tpu.memory_space<vmem>>, vector<16x16xf32>
    %c0_1 = arith.constant 0 : index
    %c0_2 = arith.constant 0 : index
    %1 = vector.load %arg2[%c0_1, %c0_2] : memref<16x32xf32, #tpu.memory_space<vmem>>, vector<16x32xf32>
    %c0_3 = arith.constant 0 : index
    %c0_4 = arith.constant 0 : index
    %2 = vector.load %arg3[%c0_3, %c0_4] : memref<1x32xf32, #tpu.memory_space<vmem>>, vector<1x32xf32>
    %cst = arith.constant dense<0.000000e+00> : vector<16x32xf32>
    %3 = tpu.matmul %0, %1, %cst {dimension_numbers = #tpu.dot_dimension_numbers<[1], [0], [0], [1], [0, 0, 1, 1], [], []>} : vector<16x16xf32>, vector<16x32xf32>, vector<16x32xf32> -> vector<16x32xf32>
    %4 = vector.broadcast %2 : vector<1x32xf32> to vector<16x32xf32>
    %5 = arith.addf %3, %4 : vector<16x32xf32>
    %cst_5 = arith.constant 0.000000e+00 : f32
    %6 = vector.broadcast %cst_5 : f32 to vector<16x32xf32>
    %7 = arith.maximumf %5, %6 : vector<16x32xf32>
    %c0_6 = arith.constant 0 : index
    %c0_7 = arith.constant 0 : index
    %8 = vector.load %arg4[%c0_6, %c0_7] : memref<32x32xf32, #tpu.memory_space<vmem>>, vector<32x32xf32>
    %c0_8 = arith.constant 0 : index
    %c0_9 = arith.constant 0 : index
    %9 = vector.load %arg5[%c0_8, %c0_9] : memref<1x32xf32, #tpu.memory_space<vmem>>, vector<1x32xf32>
    %cst_10 = arith.constant dense<0.000000e+00> : vector<16x32xf32>
    %10 = tpu.matmul %7, %8, %cst_10 {dimension_numbers = #tpu.dot_dimension_numbers<[1], [0], [0], [1], [0, 0, 1, 1], [], []>} : vector<16x32xf32>, vector<32x32xf32>, vector<16x32xf32> -> vector<16x32xf32>
    %11 = vector.broadcast %9 : vector<1x32xf32> to vector<16x32xf32>
    %12 = arith.addf %10, %11 : vector<16x32xf32>
    %cst_11 = arith.constant 0.000000e+00 : f32
    %13 = vector.broadcast %cst_11 : f32 to vector<16x32xf32>
    %14 = arith.maximumf %12, %13 : vector<16x32xf32>
    %c0_12 = arith.constant 0 : index
    %c0_13 = arith.constant 0 : index
    %15 = vector.load %arg6[%c0_12, %c0_13] : memref<32x4xf32, #tpu.memory_space<vmem>>, vector<32x4xf32>
    %c0_14 = arith.constant 0 : index
    %c0_15 = arith.constant 0 : index
    %16 = vector.load %arg7[%c0_14, %c0_15] : memref<1x4xf32, #tpu.memory_space<vmem>>, vector<1x4xf32>
    %cst_16 = arith.constant dense<0.000000e+00> : vector<16x4xf32>
    %17 = tpu.matmul %14, %15, %cst_16 {dimension_numbers = #tpu.dot_dimension_numbers<[1], [0], [0], [1], [0, 0, 1, 1], [], []>} : vector<16x32xf32>, vector<32x4xf32>, vector<16x4xf32> -> vector<16x4xf32>
    %18 = vector.broadcast %16 : vector<1x4xf32> to vector<16x4xf32>
    %19 = arith.addf %17, %18 : vector<16x4xf32>
    %c0_17 = arith.constant 0 : index
    %c0_18 = arith.constant 0 : index
    %20 = vector.load %arg8[%c0_17, %c0_18] : memref<16x4xf32, #tpu.memory_space<vmem>>, vector<16x4xf32>
    tpu.vector_store %arg8[%c0_17, %c0_18], %19 {strides = array<i32>} : memref<16x4xf32, #tpu.memory_space<vmem>>, vector<16x4xf32>,
    return
  }
  func.func @transform_0(%arg0: i32) -> (i32, i32) {
    %c0_i32 = arith.constant 0 : i32
    %c0_i32_0 = arith.constant 0 : i32
    return %arg0, %c0_i32 : i32, i32
  }
  func.func @transform_1(%arg0: i32) -> (i32, i32) {
    %c0_i32 = arith.constant 0 : i32
    %c0_i32_0 = arith.constant 0 : i32
    %c0_i32_1 = arith.constant 0 : i32
    return %c0_i32, %c0_i32_0 : i32, i32
  }
  func.func @transform_2(%arg0: i32) -> (i32, i32) {
    %c0_i32 = arith.constant 0 : i32
    %c0_i32_0 = arith.constant 0 : i32
    %c0_i32_1 = arith.constant 0 : i32
    return %c0_i32, %c0_i32_0 : i32, i32
  }
  func.func @transform_3(%arg0: i32) -> (i32, i32) {
    %c0_i32 = arith.constant 0 : i32
    %c0_i32_0 = arith.constant 0 : i32
    %c0_i32_1 = arith.constant 0 : i32
    return %c0_i32, %c0_i32_0 : i32, i32
  }
  func.func @transform_4(%arg0: i32) -> (i32, i32) {
    %c0_i32 = arith.constant 0 : i32
    %c0_i32_0 = arith.constant 0 : i32
    %c0_i32_1 = arith.constant 0 : i32
    return %c0_i32, %c0_i32_0 : i32, i32
  }
  func.func @transform_5(%arg0: i32) -> (i32, i32) {
    %c0_i32 = arith.constant 0 : i32
    %c0_i32_0 = arith.constant 0 : i32
    %c0_i32_1 = arith.constant 0 : i32
    return %c0_i32, %c0_i32_0 : i32, i32
  }
  func.func @transform_6(%arg0: i32) -> (i32, i32) {
    %c0_i32 = arith.constant 0 : i32
    %c0_i32_0 = arith.constant 0 : i32
    %c0_i32_1 = arith.constant 0 : i32
    return %c0_i32, %c0_i32_0 : i32, i32
  }
  func.func @transform_7(%arg0: i32) -> (i32, i32) {
    %c0_i32 = arith.constant 0 : i32
    %c0_i32_0 = arith.constant 0 : i32
    return %arg0, %c0_i32 : i32, i32
  }
}

</mosaic_0001>

<llo_original>
// kernel: tpu_custom_call.1
$region0: #{tpu_custom_call.1}
  #allocation0 [shape = 'u32[]', space=smem, size = 0x4, offset = 0x4, fixed_abs, tag = 'smem constant byte address 0x4 - core index']
  #allocation1 [shape = 'u32[72,128]{1,0:T(1,128)}', space=vmem, size = 0x9000, scoped, tag = 'internal scratch']
  %s0 = inlined_call_operand.hbm [shape: f32[16,16], index: 0, kind: input, shape index: {}]
  %s1 = inlined_call_operand.hbm [shape: f32[16,32], index: 1, kind: input, shape index: {}]
  %s2 = inlined_call_operand.vmem [shape: f32[1,32], index: 2, kind: input, shape index: {}]
  %s3 = inlined_call_operand.vmem [shape: f32[32,32], index: 3, kind: input, shape index: {}]
  %s4 = inlined_call_operand.vmem [shape: f32[1,32], index: 4, kind: input, shape index: {}]
  %s5 = inlined_call_operand.vmem [shape: f32[32,4], index: 5, kind: input, shape index: {}]
  %s6 = inlined_call_operand.vmem [shape: f32[1,4], index: 6, kind: input, shape index: {}]
  %s7 = inlined_call_operand.vmem [shape: f32[16,4], index: 7, kind: output, shape index: {}]
  %s8 = sld [smem:[#allocation0]]
  $region46: #{tpu_custom_call.1} parent=0
    _
  %s10 = ssub.s32 1, %s8
  %s11 = scalar_select 0, %s10, %s8
  $region1: #{tpu_custom_call.1} parent=0
    #allocation2 [shape = 'u8[8192]{0}', space=vmem, size = 0x2000, scoped, tag = 'input window, operand 0, single buffered']
    #allocation3 [shape = 's32[1]{0}', space=sflag, size = 0x4, scoped, tag = 'scoped memory for tpu_custom_call.1']
    #allocation4 [shape = 'u8[8192]{0}', space=vmem, size = 0x2000, scoped, tag = 'input window, operand 1, single buffered']
    #allocation5 [shape = 's32[1]{0}', space=sflag, size = 0x4, scoped, tag = 'scoped memory for tpu_custom_call.1']
    %12 = vsyncpa [#allocation3], 0
    %13 = vsyncpa [#allocation5], 0
    // Predicated region
    $region2: #{tpu_custom_call.1} parent=1 // pred_check
      _
    $region3: #{tpu_custom_call.1} parent=1 // pred_check_branch
      %15 = sbr.rel (0) target = $region5
    $region4: #{tpu_custom_call.1} parent=1 // pred_region
      %17 = vsyncadd [#allocation3], 0
      %s18 = sshll.u32 %s0, 4
      %s19 = int_to_ptr.hbm [resolvable:$true] %s18
      %s20 = sshll.u32 [#allocation2], 4
      %s21 = int_to_ptr.vmem [resolvable:$true] %s20
      %26 = dma.hbm_to_vmem [thread:$0]  %s19, 256, %s21, [#allocation3], 128, 128, 8
    $region5: #{tpu_custom_call.1} parent=1 // pred_fallthru
      _
    // Predicated region
    $region6: #{tpu_custom_call.1} parent=1 // pred_check
      _
    $region7: #{tpu_custom_call.1} parent=1 // pred_check_branch
      %28 = sbr.rel (0) target = $region9
    $region8: #{tpu_custom_call.1} parent=1 // pred_region
      %30 = vsyncadd [#allocation5], 0
      %s31 = sshll.u32 %s1, 4
      %s32 = int_to_ptr.hbm [resolvable:$true] %s31
      %s33 = sshll.u32 [#allocation4], 4
      %s34 = int_to_ptr.vmem [resolvable:$true] %s33
      %39 = dma.hbm_to_vmem [thread:$0]  %s32, 256, %s34, [#allocation5], 128, 128, 8
    $region9: #{tpu_custom_call.1} parent=1 // pred_fallthru
      _
    // Predicated region
    $region10: #{tpu_custom_call.1} parent=1 // pred_check
      _
    $region11: #{tpu_custom_call.1} parent=1 // pred_check_branch
      %41 = sbr.rel (0) target = $region13
    $region12: #{tpu_custom_call.1} parent=1 // pred_region
      _
    $region13: #{tpu_custom_call.1} parent=1 // pred_fallthru
      _
    // Predicated region
    $region14: #{tpu_custom_call.1} parent=1 // pred_check
      _
    $region15: #{tpu_custom_call.1} parent=1 // pred_check_branch
      %43 = sbr.rel (0) target = $region17
    $region16: #{tpu_custom_call.1} parent=1 // pred_region
      _
    $region17: #{tpu_custom_call.1} parent=1 // pred_fallthru
      _
    // Predicated region
    $region18: #{tpu_custom_call.1} parent=1 // pred_check
      _
    $region19: #{tpu_custom_call.1} parent=1 // pred_check_branch
      %45 = sbr.rel (0) target = $region21
    $region20: #{tpu_custom_call.1} parent=1 // pred_region
      _
    $region21: #{tpu_custom_call.1} parent=1 // pred_fallthru
      _
    // Predicated region
    $region22: #{tpu_custom_call.1} parent=1 // pred_check
      _
    $region23: #{tpu_custom_call.1} parent=1 // pred_check_branch
      %47 = sbr.rel (0) target = $region25
    $region24: #{tpu_custom_call.1} parent=1 // pred_region
      _
    $region25: #{tpu_custom_call.1} parent=1 // pred_fallthru
      _
    // Predicated region
    $region26: #{tpu_custom_call.1} parent=1 // pred_check
      _
    $region27: #{tpu_custom_call.1} parent=1 // pred_check_branch
      %49 = sbr.rel (0) target = $region29
    $region28: #{tpu_custom_call.1} parent=1 // pred_region
      _
    $region29: #{tpu_custom_call.1} parent=1 // pred_fallthru
      _
    // Predicated region
    $region30: #{tpu_custom_call.1} parent=1 // pred_check
      _
    $region31: #{tpu_custom_call.1} parent=1 // pred_check_branch
      %51 = sbr.rel (0) target = $region33
    $region32: #{tpu_custom_call.1} parent=1 // pred_region
      %53 = dma.done [#allocation3], 256
    $region33: #{tpu_custom_call.1} parent=1 // pred_fallthru
      _
    // Predicated region
    $region34: #{tpu_custom_call.1} parent=1 // pred_check
      _
    $region35: #{tpu_custom_call.1} parent=1 // pred_check_branch
      %55 = sbr.rel (0) target = $region37
    $region36: #{tpu_custom_call.1} parent=1 // pred_region
      %57 = dma.done [#allocation5], 256
    $region37: #{tpu_custom_call.1} parent=1 // pred_fallthru
      _
    %v58 = vld [vmem:[#allocation2] sm:$0xff]
    %v59 = vld [vmem:[#allocation2 + $0x8] sm:$0xff]
    %v60 = vld [vmem:[#allocation4] sm:$0xff]
    %v61 = vld [vmem:[#allocation4 + $0x8] sm:$0xff]
    %v62 = vld [vmem:[%s2] sm:$0x1]
    %v64 = vperm.slane %v62, 0
    %vm66 = vcmask 130048
    %v68 = vsel %vm66, %v58, 0
    %v71 = vsel %vm66, %v59, 0
    %73 = vmatpush.msra.mxu0 0.0
    %74 = vmatpush.msra.mxu0 0.0
    %75 = vmatpush.msra.mxu0 0.0
    %76 = vmatpush.msra.mxu0 0.0
    %77 = vmatpush.msra.mxu0 0.0
    %78 = vmatpush.msra.mxu0 0.0
    %79 = vmatpush.msra.mxu0 0.0
    %80 = vmatpush.msra.mxu0 0.0
    %81 = vmatpush.msra.mxu0 0.0
    %82 = vmatpush.msra.mxu0 0.0
    %83 = vmatpush.msra.mxu0 0.0
    %84 = vmatpush.msra.mxu0 0.0
    %85 = vmatpush.msra.mxu0 0.0
    %86 = vmatpush.msra.mxu0 0.0
    %87 = vmatpush.msra.mxu0 %v61
    %88 = vmatpush.msra.mxu0 %v60
    %89 = vmatmul.f32.gmra.mxu0 %v68
    %v90 = vpop.f32.mrf.mxu0
    %v91 = vadd.f32 %v64, %v90
    %92 = vmatmul.f32.gmra.mxu0 %v71
    %v93 = vpop.f32.mrf.mxu0
    %v94 = vadd.f32 %v64, %v93
    %95 = vdwg.mxu0
    %v96 = vmax.f32 %v91, 0.0
    %v97 = vmax.f32 %v94, 0.0
    %v98 = vld [vmem:[%s3] sm:$0xff]
    %v99 = vld [vmem:[%s3 + $0x8] sm:$0xff]
    %v100 = vld [vmem:[%s3 + $0x10] sm:$0xff]
    %v101 = vld [vmem:[%s3 + $0x18] sm:$0xff]
    %v102 = vld [vmem:[%s4] sm:$0x1]
    %v104 = vperm.slane %v102, 0
    %vm106 = vcmask 261120
    %v108 = vsel %vm106, %v96, 0
    %v111 = vsel %vm106, %v97, 0
    %113 = vmatpush.msra.mxu0 0.0
    %114 = vmatpush.msra.mxu0 0.0
    %115 = vmatpush.msra.mxu0 0.0
    %116 = vmatpush.msra.mxu0 0.0
    %117 = vmatpush.msra.mxu0 0.0
    %118 = vmatpush.msra.mxu0 0.0
    %119 = vmatpush.msra.mxu0 0.0
    %120 = vmatpush.msra.mxu0 0.0
    %121 = vmatpush.msra.mxu0 0.0
    %122 = vmatpush.msra.mxu0 0.0
    %123 = vmatpush.msra.mxu0 0.0
    %124 = vmatpush.msra.mxu0 0.0
    %125 = vmatpush.msra.mxu0 %v101
    %126 = vmatpush.msra.mxu0 %v100
    %127 = vmatpush.msra.mxu0 %v99
    %128 = vmatpush.msra.mxu0 %v98
    %129 = vmatmul.f32.gmra.mxu0 %v108
    %v130 = vpop.f32.mrf.mxu0
    %v131 = vadd.f32 %v104, %v130
    %132 = vmatmul.f32.gmra.mxu0 %v111
    %v133 = vpop.f32.mrf.mxu0
    %v134 = vadd.f32 %v104, %v133
    %135 = vdwg.mxu0
    %v136 = vmax.f32 %v131, 0.0
    %v137 = vmax.f32 %v134, 0.0
    %v138 = vld [vmem:[%s5] sm:$0xff]
    %v139 = vld [vmem:[%s5 + $0x8] sm:$0xff]
    %v140 = vld [vmem:[%s5 + $0x10] sm:$0xff]
    %v141 = vld [vmem:[%s5 + $0x18] sm:$0xff]
    %v142 = vld [vmem:[%s6] sm:$0x1]
    %v144 = vperm.slane %v142, 0
    %v147 = vsel %vm106, %v136, 0
    %v150 = vsel %vm106, %v137, 0
    %152 = vmatpush.msra.mxu0 0.0
    %153 = vmatpush.msra.mxu0 0.0
    %154 = vmatpush.msra.mxu0 0.0
    %155 = vmatpush.msra.mxu0 0.0
    %156 = vmatpush.msra.mxu0 0.0
    %157 = vmatpush.msra.mxu0 0.0
    %158 = vmatpush.msra.mxu0 0.0
    %159 = vmatpush.msra.mxu0 0.0
    %160 = vmatpush.msra.mxu0 0.0
    %161 = vmatpush.msra.mxu0 0.0
    %162 = vmatpush.msra.mxu0 0.0
    %163 = vmatpush.msra.mxu0 0.0
    %164 = vmatpush.msra.mxu0 %v141
    %165 = vmatpush.msra.mxu0 %v140
    %166 = vmatpush.msra.mxu0 %v139
    %167 = vmatpush.msra.mxu0 %v138
    %168 = vmatmul.f32.gmra.mxu0 %v147
    %v169 = vpop.f32.mrf.mxu0
    %v170 = vadd.f32 %v144, %v169
    %171 = vmatmul.f32.gmra.mxu0 %v150
    %v172 = vpop.f32.mrf.mxu0
    %v173 = vadd.f32 %v144, %v172
    %174 = vdwg.mxu0
    %vm175 = vcmask 31744
    %176 = vst.msk [vmem:[%s7] sm:$0xff] %vm175, %v170
    %177 = vst.msk [vmem:[%s7 + $0x8] sm:$0xff] %vm175, %v173
    // Predicated region
    $region38: #{tpu_custom_call.1} parent=1 // pred_check
      _
    $region39: #{tpu_custom_call.1} parent=1 // pred_check_branch
      %179 = sbr.rel (0) target = $region41
    $region40: #{tpu_custom_call.1} parent=1 // pred_region
      _
    $region41: #{tpu_custom_call.1} parent=1 // pred_fallthru
      _
    // Predicated region
    $region42: #{tpu_custom_call.1} parent=1 // pred_check
      _
    $region43: #{tpu_custom_call.1} parent=1 // pred_check_branch
      %181 = sbr.rel (0) target = $region45
    $region44: #{tpu_custom_call.1} parent=1 // pred_region
      _
    $region45: #{tpu_custom_call.1} parent=1 // pred_fallthru
      _
    %182 = vsyncpa [#allocation3], 1
    %183 = vsyncpa [#allocation5], 1

// kernel: tpu_custom_call.1
$region0: #{tpu_custom_call.1}
  #allocation0 [shape = 'u32[]', space=smem, size = 0x4, offset = 0x4, fixed_abs, tag = 'smem constant byte address 0x4 - core index']
  #allocation1 [shape = 'u32[72,128]{1,0:T(1,128)}', space=vmem, size = 0x9000, scoped, tag = 'internal scratch']
  %s0 = inlined_call_operand.hbm [shape: f32[16,16], index: 0, kind: input, shape index: {}]
  %s1 = inlined_call_operand.hbm [shape: f32[16,32], index: 1, kind: input, shape index: {}]
  %s2 = inlined_call_operand.vmem [shape: f32[1,32], index: 2, kind: input, shape index: {}]
  %s3 = inlined_call_operand.vmem [shape: f32[32,32], index: 3, kind: input, shape index: {}]
  %s4 = inlined_call_operand.vmem [shape: f32[1,32], index: 4, kind: input, shape index: {}]
  %s5 = inlined_call_operand.vmem [shape: f32[32,4], index: 5, kind: input, shape index: {}]
  %s6 = inlined_call_operand.vmem [shape: f32[1,4], index: 6, kind: input, shape index: {}]
  %s7 = inlined_call_operand.vmem [shape: f32[16,4], index: 7, kind: output, shape index: {}]
  %s8 = sld [smem:[#allocation0]]
  $region46: #{tpu_custom_call.1} parent=0
    _
  %s10 = ssub.s32 1, %s8
  %s11 = scalar_select 0, %s10, %s8
  $region1: #{tpu_custom_call.1} parent=0
    #allocation2 [shape = 'u8[8192]{0}', space=vmem, size = 0x2000, scoped, tag = 'input window, operand 0, single buffered']
    #allocation3 [shape = 's32[1]{0}', space=sflag, size = 0x4, scoped, tag = 'scoped memory for tpu_custom_call.1']
    #allocation4 [shape = 'u8[8192]{0}', space=vmem, size = 0x2000, scoped, tag = 'input window, operand 1, single buffered']
    #allocation5 [shape = 's32[1]{0}', space=sflag, size = 0x4, scoped, tag = 'scoped memory for tpu_custom_call.1']
    %12 = vsyncpa [#allocation3], 0
    %13 = vsyncpa [#allocation5], 0
    // Predicated region
    $region2: #{tpu_custom_call.1} parent=1 // pred_check
      _
    $region3: #{tpu_custom_call.1} parent=1 // pred_check_branch
      %15 = sbr.rel (0) target = $region5
    $region4: #{tpu_custom_call.1} parent=1 // pred_region
      %17 = vsyncadd [#allocation3], 0
      %s18 = sshll.u32 %s0, 4
      %s19 = int_to_ptr.hbm [resolvable:$true] %s18
      %s20 = sshll.u32 [#allocation2], 4
      %s21 = int_to_ptr.vmem [resolvable:$true] %s20
      %26 = dma.hbm_to_vmem [thread:$0]  %s19, 256, %s21, [#allocation3], 128, 128, 8
    $region5: #{tpu_custom_call.1} parent=1 // pred_fallthru
      _
    // Predicated region
    $region6: #{tpu_custom_call.1} parent=1 // pred_check
      _
    $region7: #{tpu_custom_call.1} parent=1 // pred_check_branch
      %28 = sbr.rel (0) target = $region9
    $region8: #{tpu_custom_call.1} parent=1 // pred_region
      %30 = vsyncadd [#allocation5], 0
      %s31 = sshll.u32 %s1, 4
      %s32 = int_to_ptr.hbm [resolvable:$true] %s31
      %s33 = sshll.u32 [#allocation4], 4
      %s34 = int_to_ptr.vmem [resolvable:$true] %s33
      %39 = dma.hbm_to_vmem [thread:$0]  %s32, 256, %s34, [#allocation5], 128, 128, 8
    $region9: #{tpu_custom_call.1} parent=1 // pred_fallthru
      _
    // Predicated region
    $region10: #{tpu_custom_call.1} parent=1 // pred_check
      _
    $region11: #{tpu_custom_call.1} parent=1 // pred_check_branch
      %41 = sbr.rel (0) target = $region13
    $region12: #{tpu_custom_call.1} parent=1 // pred_region
      _
    $region13: #{tpu_custom_call.1} parent=1 // pred_fallthru
      _
    // Predicated region
    $region14: #{tpu_custom_call.1} parent=1 // pred_check
      _
    $region15: #{tpu_custom_call.1} parent=1 // pred_check_branch
      %43 = sbr.rel (0) target = $region17
    $region16: #{tpu_custom_call.1} parent=1 // pred_region
      _
    $region17: #{tpu_custom_call.1} parent=1 // pred_fallthru
      _
    // Predicated region
    $region18: #{tpu_custom_call.1} parent=1 // pred_check
      _
    $region19: #{tpu_custom_call.1} parent=1 // pred_check_branch
      %45 = sbr.rel (0) target = $region21
    $region20: #{tpu_custom_call.1} parent=1 // pred_region
      _
    $region21: #{tpu_custom_call.1} parent=1 // pred_fallthru
      _
    // Predicated region
    $region22: #{tpu_custom_call.1} parent=1 // pred_check
      _
    $region23: #{tpu_custom_call.1} parent=1 // pred_check_branch
      %47 = sbr.rel (0) target = $region25
    $region24: #{tpu_custom_call.1} parent=1 // pred_region
      _
    $region25: #{tpu_custom_call.1} parent=1 // pred_fallthru
      _
    // Predicated region
    $region26: #{tpu_custom_call.1} parent=1 // pred_check
      _
    $region27: #{tpu_custom_call.1} parent=1 // pred_check_branch
      %49 = sbr.rel (0) target = $region29
    $region28: #{tpu_custom_call.1} parent=1 // pred_region
      _
    $region29: #{tpu_custom_call.1} parent=1 // pred_fallthru
      _
    // Predicated region
    $region30: #{tpu_custom_call.1} parent=1 // pred_check
      _
    $region31: #{tpu_custom_call.1} parent=1 // pred_check_branch
      %51 = sbr.rel (0) target = $region33
    $region32: #{tpu_custom_call.1} parent=1 // pred_region
      %53 = dma.done [#allocation3], 256
    $region33: #{tpu_custom_call.1} parent=1 // pred_fallthru
      _
    // Predicated region
    $region34: #{tpu_custom_call.1} parent=1 // pred_check
      _
    $region35: #{tpu_custom_call.1} parent=1 // pred_check_branch
      %55 = sbr.rel (0) target = $region37
    $region36: #{tpu_custom_call.1} parent=1 // pred_region
      %57 = dma.done [#allocation5], 256
    $region37: #{tpu_custom_call.1} parent=1 // pred_fallthru
      _
    %v58 = vld [vmem:[#allocation2] sm:$0xff]
    %v59 = vld [vmem:[#allocation2 + $0x8] sm:$0xff]
    %v60 = vld [vmem:[#allocation4] sm:$0xff]
    %v61 = vld [vmem:[#allocation4 + $0x8] sm:$0xff]
    %v62 = vld [vmem:[%s2] sm:$0x1]
    %v64 = vperm.slane %v62, 0
    %vm66 = vcmask 130048
    %v68 = vsel %vm66, %v58, 0
    %v71 = vsel %vm66, %v59, 0
    %73 = vmatpush.msra.mxu0 0.0
    %74 = vmatpush.msra.mxu0 0.0
    %75 = vmatpush.msra.mxu0 0.0
    %76 = vmatpush.msra.mxu0 0.0
    %77 = vmatpush.msra.mxu0 0.0
    %78 = vmatpush.msra.mxu0 0.0
    %79 = vmatpush.msra.mxu0 0.0
    %80 = vmatpush.msra.mxu0 0.0
    %81 = vmatpush.msra.mxu0 0.0
    %82 = vmatpush.msra.mxu0 0.0
    %83 = vmatpush.msra.mxu0 0.0
    %84 = vmatpush.msra.mxu0 0.0
    %85 = vmatpush.msra.mxu0 0.0
    %86 = vmatpush.msra.mxu0 0.0
    %87 = vmatpush.msra.mxu0 %v61
    %88 = vmatpush.msra.mxu0 %v60
    %89 = vmatmul.f32.gmra.mxu0 %v68
    %v90 = vpop.f32.mrf.mxu0
    %v91 = vadd.f32 %v64, %v90
    %92 = vmatmul.f32.gmra.mxu0 %v71
    %v93 = vpop.f32.mrf.mxu0
    %v94 = vadd.f32 %v64, %v93
    %95 = vdwg.mxu0
    %v96 = vmax.f32 %v91, 0.0
    %v97 = vmax.f32 %v94, 0.0
    %v98 = vld [vmem:[%s3] sm:$0xff]
    %v99 = vld [vmem:[%s3 + $0x8] sm:$0xff]
    %v100 = vld [vmem:[%s3 + $0x10] sm:$0xff]
    %v101 = vld [vmem:[%s3 + $0x18] sm:$0xff]
    %v102 = vld [vmem:[%s4] sm:$0x1]
    %v104 = vperm.slane %v102, 0
    %vm106 = vcmask 261120
    %v108 = vsel %vm106, %v96, 0
    %v111 = vsel %vm106, %v97, 0
    %113 = vmatpush.msra.mxu0 0.0
    %114 = vmatpush.msra.mxu0 0.0
    %115 = vmatpush.msra.mxu0 0.0
    %116 = vmatpush.msra.mxu0 0.0
    %117 = vmatpush.msra.mxu0 0.0
    %118 = vmatpush.msra.mxu0 0.0
    %119 = vmatpush.msra.mxu0 0.0
    %120 = vmatpush.msra.mxu0 0.0
    %121 = vmatpush.msra.mxu0 0.0
    %122 = vmatpush.msra.mxu0 0.0
    %123 = vmatpush.msra.mxu0 0.0
    %124 = vmatpush.msra.mxu0 0.0
    %125 = vmatpush.msra.mxu0 %v101
    %126 = vmatpush.msra.mxu0 %v100
    %127 = vmatpush.msra.mxu0 %v99
    %128 = vmatpush.msra.mxu0 %v98
    %129 = vmatmul.f32.gmra.mxu0 %v108
    %v130 = vpop.f32.mrf.mxu0
    %v131 = vadd.f32 %v104, %v130
    %132 = vmatmul.f32.gmra.mxu0 %v111
    %v133 = vpop.f32.mrf.mxu0
    %v134 = vadd.f32 %v104, %v133
    %135 = vdwg.mxu0
    %v136 = vmax.f32 %v131, 0.0
    %v137 = vmax.f32 %v134, 0.0
    %v138 = vld [vmem:[%s5] sm:$0xff]
    %v139 = vld [vmem:[%s5 + $0x8] sm:$0xff]
    %v140 = vld [vmem:[%s5 + $0x10] sm:$0xff]
    %v141 = vld [vmem:[%s5 + $0x18] sm:$0xff]
    %v142 = vld [vmem:[%s6] sm:$0x1]
    %v144 = vperm.slane %v142, 0
    %v147 = vsel %vm106, %v136, 0
    %v150 = vsel %vm106, %v137, 0
    %152 = vmatpush.msra.mxu0 0.0
    %153 = vmatpush.msra.mxu0 0.0
    %154 = vmatpush.msra.mxu0 0.0
    %155 = vmatpush.msra.mxu0 0.0
    %156 = vmatpush.msra.mxu0 0.0
    %157 = vmatpush.msra.mxu0 0.0
    %158 = vmatpush.msra.mxu0 0.0
    %159 = vmatpush.msra.mxu0 0.0
    %160 = vmatpush.msra.mxu0 0.0
    %161 = vmatpush.msra.mxu0 0.0
    %162 = vmatpush.msra.mxu0 0.0
    %163 = vmatpush.msra.mxu0 0.0
    %164 = vmatpush.msra.mxu0 %v141
    %165 = vmatpush.msra.mxu0 %v140
    %166 = vmatpush.msra.mxu0 %v139
    %167 = vmatpush.msra.mxu0 %v138
    %168 = vmatmul.f32.gmra.mxu0 %v147
    %v169 = vpop.f32.mrf.mxu0
    %v170 = vadd.f32 %v144, %v169
    %171 = vmatmul.f32.gmra.mxu0 %v150
    %v172 = vpop.f32.mrf.mxu0
    %v173 = vadd.f32 %v144, %v172
    %174 = vdwg.mxu0
    %vm175 = vcmask 31744
    %176 = vst.msk [vmem:[%s7] sm:$0xff] %vm175, %v170
    %177 = vst.msk [vmem:[%s7 + $0x8] sm:$0xff] %vm175, %v173
    // Predicated region
    $region38: #{tpu_custom_call.1} parent=1 // pred_check
      _
    $region39: #{tpu_custom_call.1} parent=1 // pred_check_branch
      %179 = sbr.rel (0) target = $region41
    $region40: #{tpu_custom_call.1} parent=1 // pred_region
      _
    $region41: #{tpu_custom_call.1} parent=1 // pred_fallthru
      _
    // Predicated region
    $region42: #{tpu_custom_call.1} parent=1 // pred_check
      _
    $region43: #{tpu_custom_call.1} parent=1 // pred_check_branch
      %181 = sbr.rel (0) target = $region45
    $region44: #{tpu_custom_call.1} parent=1 // pred_region
      _
    $region45: #{tpu_custom_call.1} parent=1 // pred_fallthru
      _
    %182 = vsyncpa [#allocation3], 1
    %183 = vsyncpa [#allocation5], 1

</llo_original>
